<compile_context>
chip_gen: v7x
topology: tpu7x:2x2x1
jax: 0.10.0
libtpu: 0.0.40
codegen_flags: <defaults>
</compile_context>

<pallas_src>
import functools

import jax
import jax.numpy as jnp
from jax.experimental import pallas as pl
from jax.experimental.pallas import tpu as pltpu


_PARAM_ORDER = ["w1", "b1", "wih", "bih", "whh", "bhh", "w2", "b2"]


def _round_up(x, m):
    return ((x + m - 1) // m) * m


def _sublane_multiple(dtype):
    # min second-to-last tile dim by itemsize (f32: 8, bf16: 16, int8/fp8: 32)
    return {4: 8, 2: 16, 1: 32}[jnp.dtype(dtype).itemsize]


def _tpu_batch_tile_default():
    """Returns (default batch tile, enforce grid >= 2 for 2-TC chips)."""
    try:
        kind = jax.devices()[0].device_kind.lower()
    except Exception:
        return 4096, False
    if "v7" in kind:
        return 8192, True      # 2 TCs: keep >= 2 grid steps so both get work
    if "v6" in kind:
        return 4096, False
    if "v5" in kind:
        return 2048, False
    return 4096, False


def rnn_agent_kernel(
    x_ref, h_ref,                 # batch-tiled activations (streamed dtype)
    w1_ref, b1_ref,               # fc1            (D_in -> H)
    wih_ref, bih_ref,             # GRU input->gates  (H -> 3H, order r,z,n)
    whh_ref, bhh_ref,             # GRU hidden->gates (H -> 3H)
    w2_ref, b2_ref,               # fc2            (H -> n_actions)
    q_out_ref, h_out_ref,
):
    H = h_ref.shape[1]

    def linear(a, w_ref, b_ref):
        # Feed activations at the weight dtype (no f32 round trip), accumulate f32.
        w = w_ref[...]
        if a.dtype != w.dtype:
            a = a.astype(w.dtype)
        return (jnp.dot(a, w, preferred_element_type=jnp.float32)
                + b_ref[...].astype(jnp.float32))

    x_in = x_ref[...]                       # (TB, D_in), streamed dtype
    h_raw = h_ref[...]                      # (TB, H),   streamed dtype
    h_in = h_raw.astype(jnp.float32)

    # ---- fc1 + ReLU ----
    x = jnp.maximum(linear(x_in, w1_ref, b1_ref), 0.0)          # (TB, H) f32

    # ---- GRU cell (PyTorch GRUCell, gate order r, z, n) ----
    gi = linear(x, wih_ref, bih_ref)                            # (TB, 3H) f32
    gh = linear(h_raw, whh_ref, bhh_ref)                        # (TB, 3H) f32

    r = jax.nn.sigmoid(gi[:, 0:H] + gh[:, 0:H])
    z = jax.nn.sigmoid(gi[:, H:2 * H] + gh[:, H:2 * H])
    n = jnp.tanh(gi[:, 2 * H:] + r * gh[:, 2 * H:])
    h_new = (1.0 - z) * n + z * h_in                            # (TB, H) f32

    # ---- fc2 ----
    q = linear(h_new, w2_ref, b2_ref)                           # (TB, A) f32

    q_out_ref[...] = q.astype(q_out_ref.dtype)
    h_out_ref[...] = h_new.astype(h_out_ref.dtype)


def init_rnn_agent_params(key, input_shape, n_actions, hidden_dim,
                          dtype=jnp.float32):
    """PyTorch-style init; weights stored as (in, out), biases as (1, out)."""
    def lin(k, fan_in, fan_out, bound):
        kw, kb = jax.random.split(k)
        w = jax.random.uniform(kw, (fan_in, fan_out), dtype, -bound, bound)
        b = jax.random.uniform(kb, (1, fan_out), dtype, -bound, bound)
        return w, b

    k1, k2, k3, k4 = jax.random.split(key, 4)
    p = {}
    p["w1"], p["b1"] = lin(k1, input_shape, hidden_dim,
                           1.0 / float(input_shape) ** 0.5)
    gru_bound = 1.0 / float(hidden_dim) ** 0.5
    p["wih"], p["bih"] = lin(k2, hidden_dim, 3 * hidden_dim, gru_bound)
    p["whh"], p["bhh"] = lin(k3, hidden_dim, 3 * hidden_dim, gru_bound)
    p["w2"], p["b2"] = lin(k4, hidden_dim, n_actions,
                           1.0 / float(hidden_dim) ** 0.5)
    return p


@functools.partial(jax.jit, static_argnames=("tb",))
def rnn_agent_forward(inputs, hidden_state, params, tb=None):
    """inputs: (B, input_shape), hidden_state: (..., hidden_dim) -> (q, h)."""
    B, D_in = inputs.shape
    H = params["w1"].shape[1]
    A = params["w2"].shape[1]

    h_in = hidden_state.reshape(-1, H)       # matches torch .reshape(-1, hidden_dim)
    q_dtype = inputs.dtype
    h_dtype = h_in.dtype

    # ---- batch tile selection (generation tuned, dtype-aware sublane multiple) ----
    tb_default, enforce_two_steps = _tpu_batch_tile_default()
    if tb is None:
        tb = tb_default
    mult = max(_sublane_multiple(inputs.dtype), _sublane_multiple(h_in.dtype))
    tb_eff = min(int(tb), _round_up(B, mult))
    if enforce_two_steps:  # v7x: keep >= 2 grid steps so both TensorCores are used
        tb_eff = min(tb_eff, max(mult, _round_up((B + 1) // 2, mult)))
    tb_eff = max(_round_up(tb_eff, mult), mult)

    grid = (pl.cdiv(B, tb_eff),)             # ragged last block handled by Pallas

    def batch_spec(cols):
        return pl.BlockSpec((tb_eff, cols), lambda i: (i, 0))

    param_args = [params[k] for k in _PARAM_ORDER]
    param_specs = [pl.BlockSpec(p.shape, lambda i: (0, 0)) for p in param_args]

    # ---- right-sized VMEM limit: 2x double-buffered I/O tiles + f32 intermediates + weights ----
    isz = lambda d: jnp.dtype(d).itemsize
    io_tile_bytes = tb_eff * (D_in * isz(inputs.dtype) + H * isz(h_in.dtype)
                              + A * isz(q_dtype) + H * isz(h_dtype))
    interm_bytes = tb_eff * (12 * H + A) * 4          # x, gi, gh, r/z/n, h_in, h_new, q in f32
    weight_bytes = sum(p.size * isz(p.dtype) for p in param_args)
    vmem_limit = int(min(64 << 20,
                         max(16 << 20,
                             2 * io_tile_bytes + interm_bytes + weight_bytes + (4 << 20))))

    q, h = pl.pallas_call(
        rnn_agent_kernel,
        out_shape=(
            jax.ShapeDtypeStruct((B, A), q_dtype),
            jax.ShapeDtypeStruct((B, H), h_dtype),
        ),
        grid_spec=pltpu.PrefetchScalarGridSpec(
            num_scalar_prefetch=0,
            grid=grid,
            in_specs=[batch_spec(D_in), batch_spec(H)] + param_specs,
            out_specs=(
                pl.BlockSpec((tb_eff, A), lambda i: (i, 0)),
                pl.BlockSpec((tb_eff, H), lambda i: (i, 0)),
            ),
        ),
        compiler_params=pltpu.CompilerParams(
            dimension_semantics=("parallel",),
            vmem_limit_bytes=vmem_limit,
        ),
    )(inputs, h_in, *param_args)

    return q, h


def rnn_agent_reference(inputs, hidden_state, params):
    """Plain-JAX reference mirroring torch RNNAgent.forward."""
    H = params["w1"].shape[1]
    x = jax.nn.relu(inputs @ params["w1"] + params["b1"])
    h_in = hidden_state.reshape(-1, H)
    gi = x @ params["wih"] + params["bih"]
    gh = h_in @ params["whh"] + params["bhh"]
    r = jax.nn.sigmoid(gi[:, :H] + gh[:, :H])
    z = jax.nn.sigmoid(gi[:, H:2 * H] + gh[:, H:2 * H])
    n = jnp.tanh(gi[:, 2 * H:] + r * gh[:, 2 * H:])
    h = (1.0 - z) * n + z * h_in
    q = h @ params["w2"] + params["b2"]
    return q, h


if __name__ == "__main__":
    B, D_IN, HIDDEN, N_ACTIONS = 8, 32, 64, 8

    key = jax.random.PRNGKey(0)
    k_params, k_in, k_h, k_in3, k_h3 = jax.random.split(key, 5)

    params_f32 = init_rnn_agent_params(k_params, D_IN, N_ACTIONS, HIDDEN,
                                       dtype=jnp.float32)
    inputs = jax.random.normal(k_in, (B, D_IN), jnp.float32)
    hidden = jax.random.normal(k_h, (B, HIDDEN), jnp.float32)

    # ---- 1) f32 streaming path, tight tolerance ----
    q, h = jax.block_until_ready(rnn_agent_forward(inputs, hidden, params_f32))
    q_ref, h_ref = rnn_agent_reference(inputs, hidden, params_f32)
    assert q.shape == (B, N_ACTIONS) and h.shape == (B, HIDDEN)
    assert jnp.allclose(q, q_ref, atol=1e-3, rtol=1e-3)
    assert jnp.allclose(h, h_ref, atol=1e-3, rtol=1e-3)

    # ---- 2) bf16 streaming path (default perf config), looser tolerance ----
    params_bf = {k: v.astype(jnp.bfloat16) for k, v in params_f32.items()}
    params_deq = {k: v.astype(jnp.float32) for k, v in params_bf.items()}
    x_bf = inputs.astype(jnp.bfloat16)
    h_bf = hidden.astype(jnp.bfloat16)
    q2, h2 = jax.block_until_ready(rnn_agent_forward(x_bf, h_bf, params_bf))
    q2_ref, h2_ref = rnn_agent_reference(x_bf.astype(jnp.float32),
                                         h_bf.astype(jnp.float32), params_deq)
    assert q2.dtype == jnp.bfloat16 and h2.dtype == jnp.bfloat16
    assert jnp.allclose(q2.astype(jnp.float32), q2_ref, atol=5e-2, rtol=5e-2)
    assert jnp.allclose(h2.astype(jnp.float32), h2_ref, atol=5e-2, rtol=5e-2)

    # ---- 3) ragged-grid path: B not a multiple of the batch tile, no wrapper pad ----
    B3 = 300
    x3 = jax.random.normal(k_in3, (B3, D_IN), jnp.float32)
    h3 = jax.random.normal(k_h3, (B3, HIDDEN), jnp.float32)
    q3, h3o = jax.block_until_ready(rnn_agent_forward(x3, h3, params_f32, tb=128))
    q3_ref, h3_ref = rnn_agent_reference(x3, h3, params_f32)
    assert q3.shape == (B3, N_ACTIONS) and h3o.shape == (B3, HIDDEN)
    assert jnp.allclose(q3, q3_ref, atol=1e-3, rtol=1e-3)
    assert jnp.allclose(h3o, h3_ref, atol=1e-3, rtol=1e-3)

    print("KERNEL_OK")
</pallas_src>

<mosaic_0001>
module attributes {stable_mosaic.version = 11 : i64} {
  func.func @rnn_agent_kernel(%arg0: i32, %arg1: memref<8x32xf32, #tpu.memory_space<vmem>>, %arg2: memref<8x64xf32, #tpu.memory_space<vmem>>, %arg3: memref<32x64xf32, #tpu.memory_space<vmem>>, %arg4: memref<1x64xf32, #tpu.memory_space<vmem>>, %arg5: memref<64x192xf32, #tpu.memory_space<vmem>>, %arg6: memref<1x192xf32, #tpu.memory_space<vmem>>, %arg7: memref<64x192xf32, #tpu.memory_space<vmem>>, %arg8: memref<1x192xf32, #tpu.memory_space<vmem>>, %arg9: memref<64x8xf32, #tpu.memory_space<vmem>>, %arg10: memref<1x8xf32, #tpu.memory_space<vmem>>, %arg11: memref<8x8xf32, #tpu.memory_space<vmem>>, %arg12: memref<8x64xf32, #tpu.memory_space<vmem>>) attributes {dimension_semantics = [#tpu.dimension_semantics<parallel>], iteration_bounds = array<i64: 1>, scalar_prefetch = 0 : i64, scratch_operands = 0 : i64, tpu.core_type = #tpu.core_type<tc>, window_params = [{transform_indices = @transform_0, window_bounds = array<i64: 8, 32>}, {transform_indices = @transform_1, window_bounds = array<i64: 8, 64>}, {pipeline_mode = #tpu.pipeline_mode<synchronous>, transform_indices = @transform_2, window_bounds = array<i64: 32, 64>}, {pipeline_mode = #tpu.pipeline_mode<synchronous>, transform_indices = @transform_3, window_bounds = array<i64: 1, 64>}, {pipeline_mode = #tpu.pipeline_mode<synchronous>, transform_indices = @transform_4, window_bounds = array<i64: 64, 192>}, {pipeline_mode = #tpu.pipeline_mode<synchronous>, transform_indices = @transform_5, window_bounds = array<i64: 1, 192>}, {pipeline_mode = #tpu.pipeline_mode<synchronous>, transform_indices = @transform_6, window_bounds = array<i64: 64, 192>}, {pipeline_mode = #tpu.pipeline_mode<synchronous>, transform_indices = @transform_7, window_bounds = array<i64: 1, 192>}, {pipeline_mode = #tpu.pipeline_mode<synchronous>, transform_indices = @transform_8, window_bounds = array<i64: 64, 8>}, {pipeline_mode = #tpu.pipeline_mode<synchronous>, transform_indices = @transform_9, window_bounds = array<i64: 1, 8>}, {transform_indices = @transform_10, window_bounds = array<i64: 8, 8>}, {transform_indices = @transform_11, window_bounds = array<i64: 8, 64>}]} {
    %c0 = arith.constant 0 : index
    %c0_0 = arith.constant 0 : index
    %0 = vector.load %arg1[%c0, %c0_0] : memref<8x32xf32, #tpu.memory_space<vmem>>, vector<8x32xf32>
    %c0_1 = arith.constant 0 : index
    %c0_2 = arith.constant 0 : index
    %1 = vector.load %arg2[%c0_1, %c0_2] : memref<8x64xf32, #tpu.memory_space<vmem>>, vector<8x64xf32>
    %c0_3 = arith.constant 0 : index
    %c0_4 = arith.constant 0 : index
    %2 = vector.load %arg3[%c0_3, %c0_4] : memref<32x64xf32, #tpu.memory_space<vmem>>, vector<32x64xf32>
    %cst = arith.constant dense<0.000000e+00> : vector<8x64xf32>
    %3 = tpu.matmul %0, %2, %cst {dimension_numbers = #tpu.dot_dimension_numbers<[1], [0], [0], [1], [0, 0, 1, 1], [], []>} : vector<8x32xf32>, vector<32x64xf32>, vector<8x64xf32> -> vector<8x64xf32>
    %c0_5 = arith.constant 0 : index
    %c0_6 = arith.constant 0 : index
    %4 = vector.load %arg4[%c0_5, %c0_6] : memref<1x64xf32, #tpu.memory_space<vmem>>, vector<1x64xf32>
    %5 = vector.broadcast %4 : vector<1x64xf32> to vector<8x64xf32>
    %6 = arith.addf %3, %5 : vector<8x64xf32>
    %cst_7 = arith.constant 0.000000e+00 : f32
    %7 = vector.broadcast %cst_7 : f32 to vector<8x64xf32>
    %8 = arith.maximumf %6, %7 : vector<8x64xf32>
    %c0_8 = arith.constant 0 : index
    %c0_9 = arith.constant 0 : index
    %9 = vector.load %arg5[%c0_8, %c0_9] : memref<64x192xf32, #tpu.memory_space<vmem>>, vector<64x192xf32>
    %cst_10 = arith.constant dense<0.000000e+00> : vector<8x192xf32>
    %10 = tpu.matmul %8, %9, %cst_10 {dimension_numbers = #tpu.dot_dimension_numbers<[1], [0], [0], [1], [0, 0, 1, 1], [], []>} : vector<8x64xf32>, vector<64x192xf32>, vector<8x192xf32> -> vector<8x192xf32>
    %c0_11 = arith.constant 0 : index
    %c0_12 = arith.constant 0 : index
    %11 = vector.load %arg6[%c0_11, %c0_12] : memref<1x192xf32, #tpu.memory_space<vmem>>, vector<1x192xf32>
    %12 = vector.broadcast %11 : vector<1x192xf32> to vector<8x192xf32>
    %13 = arith.addf %10, %12 : vector<8x192xf32>
    %c0_13 = arith.constant 0 : index
    %c0_14 = arith.constant 0 : index
    %14 = vector.load %arg7[%c0_13, %c0_14] : memref<64x192xf32, #tpu.memory_space<vmem>>, vector<64x192xf32>
    %cst_15 = arith.constant dense<0.000000e+00> : vector<8x192xf32>
    %15 = tpu.matmul %1, %14, %cst_15 {dimension_numbers = #tpu.dot_dimension_numbers<[1], [0], [0], [1], [0, 0, 1, 1], [], []>} : vector<8x64xf32>, vector<64x192xf32>, vector<8x192xf32> -> vector<8x192xf32>
    %c0_16 = arith.constant 0 : index
    %c0_17 = arith.constant 0 : index
    %16 = vector.load %arg8[%c0_16, %c0_17] : memref<1x192xf32, #tpu.memory_space<vmem>>, vector<1x192xf32>
    %17 = vector.broadcast %16 : vector<1x192xf32> to vector<8x192xf32>
    %18 = arith.addf %15, %17 : vector<8x192xf32>
    %19 = vector.extract_strided_slice %13 {offsets = [0, 0], sizes = [8, 64], strides = [1, 1]} : vector<8x192xf32> to vector<8x64xf32>
    %20 = vector.extract_strided_slice %18 {offsets = [0, 0], sizes = [8, 64], strides = [1, 1]} : vector<8x192xf32> to vector<8x64xf32>
    %21 = arith.addf %19, %20 : vector<8x64xf32>
    %22 = arith.negf %21 : vector<8x64xf32>
    %23 = math.exp %22 : vector<8x64xf32>
    %cst_18 = arith.constant 1.000000e+00 : f32
    %24 = vector.broadcast %cst_18 : f32 to vector<8x64xf32>
    %25 = arith.addf %24, %23 : vector<8x64xf32>
    %26 = arith.divf %24, %25 : vector<8x64xf32>
    %27 = vector.extract_strided_slice %13 {offsets = [0, 64], sizes = [8, 64], strides = [1, 1]} : vector<8x192xf32> to vector<8x64xf32>
    %28 = vector.extract_strided_slice %18 {offsets = [0, 64], sizes = [8, 64], strides = [1, 1]} : vector<8x192xf32> to vector<8x64xf32>
    %29 = arith.addf %27, %28 : vector<8x64xf32>
    %30 = arith.negf %29 : vector<8x64xf32>
    %31 = math.exp %30 : vector<8x64xf32>
    %cst_19 = arith.constant 1.000000e+00 : f32
    %32 = vector.broadcast %cst_19 : f32 to vector<8x64xf32>
    %33 = arith.addf %32, %31 : vector<8x64xf32>
    %34 = arith.divf %32, %33 : vector<8x64xf32>
    %35 = vector.extract_strided_slice %13 {offsets = [0, 128], sizes = [8, 64], strides = [1, 1]} : vector<8x192xf32> to vector<8x64xf32>
    %36 = vector.extract_strided_slice %18 {offsets = [0, 128], sizes = [8, 64], strides = [1, 1]} : vector<8x192xf32> to vector<8x64xf32>
    %37 = arith.mulf %26, %36 : vector<8x64xf32>
    %38 = arith.addf %35, %37 : vector<8x64xf32>
    %39 = math.tanh %38 : vector<8x64xf32>
    %cst_20 = arith.constant 1.000000e+00 : f32
    %40 = vector.broadcast %cst_20 : f32 to vector<8x64xf32>
    %41 = arith.subf %40, %34 : vector<8x64xf32>
    %42 = arith.mulf %41, %39 : vector<8x64xf32>
    %43 = arith.mulf %34, %1 : vector<8x64xf32>
    %44 = arith.addf %42, %43 : vector<8x64xf32>
    %c0_21 = arith.constant 0 : index
    %c0_22 = arith.constant 0 : index
    %45 = vector.load %arg9[%c0_21, %c0_22] : memref<64x8xf32, #tpu.memory_space<vmem>>, vector<64x8xf32>
    %cst_23 = arith.constant dense<0.000000e+00> : vector<8x8xf32>
    %46 = tpu.matmul %44, %45, %cst_23 {dimension_numbers = #tpu.dot_dimension_numbers<[1], [0], [0], [1], [0, 0, 1, 1], [], []>} : vector<8x64xf32>, vector<64x8xf32>, vector<8x8xf32> -> vector<8x8xf32>
    %c0_24 = arith.constant 0 : index
    %c0_25 = arith.constant 0 : index
    %47 = vector.load %arg10[%c0_24, %c0_25] : memref<1x8xf32, #tpu.memory_space<vmem>>, vector<1x8xf32>
    %48 = vector.broadcast %47 : vector<1x8xf32> to vector<8x8xf32>
    %49 = arith.addf %46, %48 : vector<8x8xf32>
    %c0_26 = arith.constant 0 : index
    %c0_27 = arith.constant 0 : index
    %50 = vector.load %arg11[%c0_26, %c0_27] : memref<8x8xf32, #tpu.memory_space<vmem>>, vector<8x8xf32>
    tpu.vector_store %arg11[%c0_26, %c0_27], %49 {strides = array<i32>} : memref<8x8xf32, #tpu.memory_space<vmem>>, vector<8x8xf32>,
    %c0_28 = arith.constant 0 : index
    %c0_29 = arith.constant 0 : index
    %51 = vector.load %arg12[%c0_28, %c0_29] : memref<8x64xf32, #tpu.memory_space<vmem>>, vector<8x64xf32>
    tpu.vector_store %arg12[%c0_28, %c0_29], %44 {strides = array<i32>} : memref<8x64xf32, #tpu.memory_space<vmem>>, vector<8x64xf32>,
    return
  }
  func.func @transform_0(%arg0: i32) -> (i32, i32) {
    %c0_i32 = arith.constant 0 : i32
    %c0_i32_0 = arith.constant 0 : i32
    return %arg0, %c0_i32 : i32, i32
  }
  func.func @transform_1(%arg0: i32) -> (i32, i32) {
    %c0_i32 = arith.constant 0 : i32
    %c0_i32_0 = arith.constant 0 : i32
    return %arg0, %c0_i32 : i32, i32
  }
  func.func @transform_2(%arg0: i32) -> (i32, i32) {
    %c0_i32 = arith.constant 0 : i32
    %c0_i32_0 = arith.constant 0 : i32
    %c0_i32_1 = arith.constant 0 : i32
    return %c0_i32, %c0_i32_0 : i32, i32
  }
  func.func @transform_3(%arg0: i32) -> (i32, i32) {
    %c0_i32 = arith.constant 0 : i32
    %c0_i32_0 = arith.constant 0 : i32
    %c0_i32_1 = arith.constant 0 : i32
    return %c0_i32, %c0_i32_0 : i32, i32
  }
  func.func @transform_4(%arg0: i32) -> (i32, i32) {
    %c0_i32 = arith.constant 0 : i32
    %c0_i32_0 = arith.constant 0 : i32
    %c0_i32_1 = arith.constant 0 : i32
    return %c0_i32, %c0_i32_0 : i32, i32
  }
  func.func @transform_5(%arg0: i32) -> (i32, i32) {
    %c0_i32 = arith.constant 0 : i32
    %c0_i32_0 = arith.constant 0 : i32
    %c0_i32_1 = arith.constant 0 : i32
    return %c0_i32, %c0_i32_0 : i32, i32
  }
  func.func @transform_6(%arg0: i32) -> (i32, i32) {
    %c0_i32 = arith.constant 0 : i32
    %c0_i32_0 = arith.constant 0 : i32
    %c0_i32_1 = arith.constant 0 : i32
    return %c0_i32, %c0_i32_0 : i32, i32
  }
  func.func @transform_7(%arg0: i32) -> (i32, i32) {
    %c0_i32 = arith.constant 0 : i32
    %c0_i32_0 = arith.constant 0 : i32
    %c0_i32_1 = arith.constant 0 : i32
    return %c0_i32, %c0_i32_0 : i32, i32
  }
  func.func @transform_8(%arg0: i32) -> (i32, i32) {
    %c0_i32 = arith.constant 0 : i32
    %c0_i32_0 = arith.constant 0 : i32
    %c0_i32_1 = arith.constant 0 : i32
    return %c0_i32, %c0_i32_0 : i32, i32
  }
  func.func @transform_9(%arg0: i32) -> (i32, i32) {
    %c0_i32 = arith.constant 0 : i32
    %c0_i32_0 = arith.constant 0 : i32
    %c0_i32_1 = arith.constant 0 : i32
    return %c0_i32, %c0_i32_0 : i32, i32
  }
  func.func @transform_10(%arg0: i32) -> (i32, i32) {
    %c0_i32 = arith.constant 0 : i32
    %c0_i32_0 = arith.constant 0 : i32
    return %arg0, %c0_i32 : i32, i32
  }
  func.func @transform_11(%arg0: i32) -> (i32, i32) {
    %c0_i32 = arith.constant 0 : i32
    %c0_i32_0 = arith.constant 0 : i32
    return %arg0, %c0_i32 : i32, i32
  }
}

</mosaic_0001>

<llo_original>
// kernel: rnn_agent_forward.1
$region0: #{rnn_agent_forward.1}
  #allocation0 [shape = 'u32[]', space=smem, size = 0x4, offset = 0x4, fixed_abs, tag = 'smem constant byte address 0x4 - core index']
  #allocation1 [shape = 'u32[144,128]{1,0:T(1,128)}', space=vmem, size = 0x12000, scoped, tag = 'internal scratch']
  %s0 = inlined_call_operand.vmem [shape: f32[8,32], index: 0, kind: input, shape index: {}]
  %s1 = inlined_call_operand.vmem [shape: f32[8,64], index: 1, kind: input, shape index: {}]
  %s2 = inlined_call_operand.vmem [shape: f32[32,64], index: 2, kind: input, shape index: {}]
  %s3 = inlined_call_operand.vmem [shape: f32[1,64], index: 3, kind: input, shape index: {}]
  %s4 = inlined_call_operand.hbm [shape: f32[64,192], index: 4, kind: input, shape index: {}]
  %s5 = inlined_call_operand.vmem [shape: f32[1,192], index: 5, kind: input, shape index: {}]
  %s6 = inlined_call_operand.hbm [shape: f32[64,192], index: 6, kind: input, shape index: {}]
  %s7 = inlined_call_operand.vmem [shape: f32[1,192], index: 7, kind: input, shape index: {}]
  %s8 = inlined_call_operand.vmem [shape: f32[64,8], index: 8, kind: input, shape index: {}]
  %s9 = inlined_call_operand.vmem [shape: f32[1,8], index: 9, kind: input, shape index: {}]
  %s10 = inlined_call_operand.hbm [shape: f32[8,8], index: 10, kind: output, shape index: {0}]
  %s11 = inlined_call_operand.hbm [shape: f32[8,64], index: 11, kind: output, shape index: {1}]
  %12 = xla_tuple %s10, %s11
  %s13 = sld [smem:[#allocation0]]
  $region66: #{rnn_agent_forward.1} parent=0
    _
  %s15 = ssub.s32 1, %s13
  %s16 = scalar_select 0, %s15, %s13
  $region1: #{rnn_agent_forward.1} parent=0
    #allocation2 [shape = 'u8[65536]{0}', space=vmem, size = 0x10000, scoped, tag = 'input window, operand 4, single buffered']
    #allocation3 [shape = 's32[1]{0}', space=sflag, size = 0x4, scoped, tag = 'scoped memory for rnn_agent_forward.1']
    #allocation4 [shape = 's32[1]{0}', space=sflag, size = 0x4, scoped, tag = 'scoped memory for rnn_agent_forward.1']
    #allocation5 [shape = 'u8[65536]{0}', space=vmem, size = 0x10000, scoped, tag = 'input window, operand 6, single buffered']
    #allocation6 [shape = 's32[1]{0}', space=sflag, size = 0x4, scoped, tag = 'scoped memory for rnn_agent_forward.1']
    #allocation7 [shape = 'u8[4096]{0}', space=vmem, size = 0x1000, scoped, tag = 'output window, operand 0, single buffered']
    #allocation8 [shape = 'u8[4096]{0}', space=vmem, size = 0x1000, scoped, tag = 'output window, operand 1, single buffered']
    #allocation9 [shape = 's32[1]{0}', space=sflag, size = 0x4, scoped, tag = 'scoped memory for rnn_agent_forward.1']
    %17 = vsyncpa [#allocation3], 0
    %18 = vsyncpa [#allocation6], 0
    %19 = vsyncpa [#allocation4], 0
    %20 = vsyncpa [#allocation9], 0
    // Predicated region
    $region2: #{rnn_agent_forward.1} parent=1 // pred_check
      _
    $region3: #{rnn_agent_forward.1} parent=1 // pred_check_branch
      %22 = sbr.rel (0) target = $region5
    $region4: #{rnn_agent_forward.1} parent=1 // pred_region
      _
    $region5: #{rnn_agent_forward.1} parent=1 // pred_fallthru
      _
    // Predicated region
    $region6: #{rnn_agent_forward.1} parent=1 // pred_check
      _
    $region7: #{rnn_agent_forward.1} parent=1 // pred_check_branch
      %24 = sbr.rel (0) target = $region9
    $region8: #{rnn_agent_forward.1} parent=1 // pred_region
      _
    $region9: #{rnn_agent_forward.1} parent=1 // pred_fallthru
      _
    // Predicated region
    $region10: #{rnn_agent_forward.1} parent=1 // pred_check
      _
    $region11: #{rnn_agent_forward.1} parent=1 // pred_check_branch
      %26 = sbr.rel (0) target = $region13
    $region12: #{rnn_agent_forward.1} parent=1 // pred_region
      _
    $region13: #{rnn_agent_forward.1} parent=1 // pred_fallthru
      _
    // Predicated region
    $region14: #{rnn_agent_forward.1} parent=1 // pred_check
      _
    $region15: #{rnn_agent_forward.1} parent=1 // pred_check_branch
      %28 = sbr.rel (0) target = $region17
    $region16: #{rnn_agent_forward.1} parent=1 // pred_region
      _
    $region17: #{rnn_agent_forward.1} parent=1 // pred_fallthru
      _
    // Predicated region
    $region18: #{rnn_agent_forward.1} parent=1 // pred_check
      _
    $region19: #{rnn_agent_forward.1} parent=1 // pred_check_branch
      %30 = sbr.rel (0) target = $region21
    $region20: #{rnn_agent_forward.1} parent=1 // pred_region
      %s32 = ssub.s32 2048, 2048
      %33 = vsyncadd [#allocation3], %s32
      %s34 = sshll.u32 [#allocation2], 4
      %s35 = int_to_ptr.vmem [resolvable:$true] %s34
      %40 = dma.hbm_to_vmem [thread:$0]  %s4, 2048, %s35, [#allocation3], 256, 256, 16
    $region21: #{rnn_agent_forward.1} parent=1 // pred_fallthru
      _
    // Predicated region
    $region22: #{rnn_agent_forward.1} parent=1 // pred_check
      _
    $region23: #{rnn_agent_forward.1} parent=1 // pred_check_branch
      %42 = sbr.rel (0) target = $region25
    $region24: #{rnn_agent_forward.1} parent=1 // pred_region
      _
    $region25: #{rnn_agent_forward.1} parent=1 // pred_fallthru
      _
    // Predicated region
    $region26: #{rnn_agent_forward.1} parent=1 // pred_check
      _
    $region27: #{rnn_agent_forward.1} parent=1 // pred_check_branch
      %44 = sbr.rel (0) target = $region29
    $region28: #{rnn_agent_forward.1} parent=1 // pred_region
      %s46 = ssub.s32 2048, 2048
      %47 = vsyncadd [#allocation6], %s46
      %s48 = sshll.u32 [#allocation5], 4
      %s49 = int_to_ptr.vmem [resolvable:$true] %s48
      %54 = dma.hbm_to_vmem [thread:$0]  %s6, 2048, %s49, [#allocation6], 256, 256, 16
    $region29: #{rnn_agent_forward.1} parent=1 // pred_fallthru
      _
    // Predicated region
    $region30: #{rnn_agent_forward.1} parent=1 // pred_check
      _
    $region31: #{rnn_agent_forward.1} parent=1 // pred_check_branch
      %56 = sbr.rel (0) target = $region33
    $region32: #{rnn_agent_forward.1} parent=1 // pred_region
      _
    $region33: #{rnn_agent_forward.1} parent=1 // pred_fallthru
      _
    // Predicated region
    $region34: #{rnn_agent_forward.1} parent=1 // pred_check
      _
    $region35: #{rnn_agent_forward.1} parent=1 // pred_check_branch
      %58 = sbr.rel (0) target = $region37
    $region36: #{rnn_agent_forward.1} parent=1 // pred_region
      _
    $region37: #{rnn_agent_forward.1} parent=1 // pred_fallthru
      _
    // Predicated region
    $region38: #{rnn_agent_forward.1} parent=1 // pred_check
      _
    $region39: #{rnn_agent_forward.1} parent=1 // pred_check_branch
      %60 = sbr.rel (0) target = $region41
    $region40: #{rnn_agent_forward.1} parent=1 // pred_region
      _
    $region41: #{rnn_agent_forward.1} parent=1 // pred_fallthru
      _
    // Predicated region
    $region42: #{rnn_agent_forward.1} parent=1 // pred_check
      _
    $region43: #{rnn_agent_forward.1} parent=1 // pred_check_branch
      %62 = sbr.rel (0) target = $region45
    $region44: #{rnn_agent_forward.1} parent=1 // pred_region
      %63 = dma.done [#allocation3], 2048
    $region45: #{rnn_agent_forward.1} parent=1 // pred_fallthru
      _
    // Predicated region
    $region46: #{rnn_agent_forward.1} parent=1 // pred_check
      _
    $region47: #{rnn_agent_forward.1} parent=1 // pred_check_branch
      %65 = sbr.rel (0) target = $region49
    $region48: #{rnn_agent_forward.1} parent=1 // pred_region
      %66 = dma.done [#allocation6], 2048
    $region49: #{rnn_agent_forward.1} parent=1 // pred_fallthru
      _
    %v67 = vld [vmem:[%s0] sm:$0xff]
    %v68 = vld [vmem:[%s1] sm:$0xff]
    %v69 = vld [vmem:[%s2] sm:$0xff]
    %v70 = vld [vmem:[%s2 + $0x8] sm:$0xff]
    %v71 = vld [vmem:[%s2 + $0x10] sm:$0xff]
    %v72 = vld [vmem:[%s2 + $0x18] sm:$0xff]
    %v73 = vld [vmem:[%s3] sm:$0x1]
    %v75 = vlaneseq
    %v76 = vshrl.u32 %v75, 7
    %v77 = vsub.s32 0, %v76
    %v78 = vrot.slane %v73, %v77
    %vm80 = vcmask 261120
    %v82 = vsel %vm80, %v67, 0
    %84 = vmatprep.subr.mxu0 0.0
    %85 = vmatpush1.msra.mxu0 %v69
    %86 = vmatprep.subr.mxu0 0.0
    %87 = vmatpush1.msra.mxu0 %v70
    %88 = vmatprep.subr.mxu0 0.0
    %89 = vmatpush1.msra.mxu0 %v71
    %90 = vmatprep.subr.mxu0 0.0
    %91 = vmatpush1.msra.mxu0 %v72
    %92 = vmatprep.subr.mxu0 0.0
    %93 = vmatpush1.msra.mxu0 0.0
    %94 = vmatprep.subr.mxu0 0.0
    %95 = vmatpush1.msra.mxu0 0.0
    %96 = vmatprep.subr.mxu0 0.0
    %97 = vmatpush1.msra.mxu0 0.0
    %98 = vmatprep.subr.mxu0 0.0
    %99 = vmatpush1.msra.mxu0 0.0
    %100 = vmatprep.subr.mxu0 0.0
    %101 = vmatpush1.msra.mxu0 0.0
    %102 = vmatprep.subr.mxu0 0.0
    %103 = vmatpush1.msra.mxu0 0.0
    %104 = vmatprep.subr.mxu0 0.0
    %105 = vmatpush1.msra.mxu0 0.0
    %106 = vmatprep.subr.mxu0 0.0
    %107 = vmatpush1.msra.mxu0 0.0
    %108 = vmatprep.subr.mxu0 0.0
    %109 = vmatpush1.msra.mxu0 0.0
    %110 = vmatprep.subr.mxu0 0.0
    %111 = vmatpush1.msra.mxu0 0.0
    %112 = vmatprep.subr.mxu0 0.0
    %113 = vmatpush1.msra.mxu0 0.0
    %114 = vmatprep.subr.mxu0 0.0
    %115 = vmatpush1.msra.mxu0 0.0
    %116 = vmatprep.subr.mxu0 0.0
    %117 = vmatpush1.msra.mxu0 0.0
    %118 = vmatprep.subr.mxu0 0.0
    %119 = vmatpush1.msra.mxu0 0.0
    %120 = vmatprep.subr.mxu0 0.0
    %121 = vmatpush1.msra.mxu0 0.0
    %122 = vmatprep.subr.mxu0 0.0
    %123 = vmatpush1.msra.mxu0 0.0
    %124 = vmatprep.subr.mxu0 0.0
    %125 = vmatpush1.msra.mxu0 0.0
    %126 = vmatprep.subr.mxu0 0.0
    %127 = vmatpush1.msra.mxu0 0.0
    %128 = vmatprep.subr.mxu0 0.0
    %129 = vmatpush1.msra.mxu0 0.0
    %130 = vmatprep.subr.mxu0 0.0
    %131 = vmatpush1.msra.mxu0 0.0
    %132 = vmatprep.subr.mxu0 0.0
    %133 = vmatpush1.msra.mxu0 0.0
    %134 = vmatprep.subr.mxu0 0.0
    %135 = vmatpush1.msra.mxu0 0.0
    %136 = vmatprep.subr.mxu0 0.0
    %137 = vmatpush1.msra.mxu0 0.0
    %138 = vmatprep.subr.mxu0 0.0
    %139 = vmatpush1.msra.mxu0 0.0
    %140 = vmatprep.subr.mxu0 0.0
    %141 = vmatpush1.msra.mxu0 0.0
    %142 = vmatprep.subr.mxu0 0.0
    %143 = vmatpush1.msra.mxu0 0.0
    %144 = vmatprep.subr.mxu0 0.0
    %145 = vmatpush1.msra.mxu0 0.0
    %146 = vmatprep.subr.mxu0 0.0
    %147 = vmatpush1.msra.mxu0 0.0
    %148 = vmatprep.mubr.f32.mxu0 0.0
    %149 = vmatmul.mubr.f32.gmra.mrb[0].mxu0 %v82
    %v150 = vpop.f32.mrb[0].mxu0
    %v151 = vadd.f32 %v78, %v150
    %v152 = vpop.f32.mrb[0].mxu0
    %153 = vdwg.mxu0
    %v154 = vmax.f32 %v151, 0.0
    %v155 = vld [vmem:[#allocation2] sm:$0xff]
    %v156 = vld [vmem:[#allocation2 + $0x8] sm:$0xff]
    %v157 = vld [vmem:[#allocation2 + $0x10] sm:$0xff]
    %v158 = vld [vmem:[#allocation2 + $0x18] sm:$0xff]
    %v159 = vld [vmem:[#allocation2 + $0x20] sm:$0xff]
    %v160 = vld [vmem:[#allocation2 + $0x28] sm:$0xff]
    %v161 = vld [vmem:[#allocation2 + $0x30] sm:$0xff]
    %v162 = vld [vmem:[#allocation2 + $0x38] sm:$0xff]
    %v163 = vld [vmem:[#allocation2 + $0x40] sm:$0xff]
    %v164 = vld [vmem:[#allocation2 + $0x48] sm:$0xff]
    %v165 = vld [vmem:[#allocation2 + $0x50] sm:$0xff]
    %v166 = vld [vmem:[#allocation2 + $0x58] sm:$0xff]
    %v167 = vld [vmem:[#allocation2 + $0x60] sm:$0xff]
    %v168 = vld [vmem:[#allocation2 + $0x68] sm:$0xff]
    %v169 = vld [vmem:[#allocation2 + $0x70] sm:$0xff]
    %v170 = vld [vmem:[#allocation2 + $0x78] sm:$0xff]
    %v171 = vld [vmem:[%s5] sm:$0x3]
    %v173 = vlaneseq
    %v174 = vshrl.u32 %v173, 7
    %v175 = vsub.s32 0, %v174
    %v176 = vrot.slane %v171, %v175
    %v177 = vlaneseq
    %v178 = vshrl.u32 %v177, 7
    %v179 = vsub.s32 1, %v178
    %v180 = vrot.slane %v171, %v179
    %vm183 = vcmask 523264
    %v185 = vsel %vm183, %v154, 0
    %187 = vmatprep.subr.mxu0 %v156
    %188 = vmatpush1.msra.mxu0 %v155
    %189 = vmatprep.subr.mxu0 %v158
    %190 = vmatpush1.msra.mxu0 %v157
    %191 = vmatprep.subr.mxu0 %v160
    %192 = vmatpush1.msra.mxu0 %v159
    %193 = vmatprep.subr.mxu0 %v162
    %194 = vmatpush1.msra.mxu0 %v161
    %195 = vmatprep.subr.mxu0 %v164
    %196 = vmatpush1.msra.mxu0 %v163
    %197 = vmatprep.subr.mxu0 %v166
    %198 = vmatpush1.msra.mxu0 %v165
    %199 = vmatprep.subr.mxu0 %v168
    %200 = vmatpush1.msra.mxu0 %v167
    %201 = vmatprep.subr.mxu0 %v170
    %202 = vmatpush1.msra.mxu0 %v169
    %203 = vmatprep.subr.mxu0 0.0
    %204 = vmatpush1.msra.mxu0 0.0
    %205 = vmatprep.subr.mxu0 0.0
    %206 = vmatpush1.msra.mxu0 0.0
    %207 = vmatprep.subr.mxu0 0.0
    %208 = vmatpush1.msra.mxu0 0.0
    %209 = vmatprep.subr.mxu0 0.0
    %210 = vmatpush1.msra.mxu0 0.0
    %211 = vmatprep.subr.mxu0 0.0
    %212 = vmatpush1.msra.mxu0 0.0
    %213 = vmatprep.subr.mxu0 0.0
    %214 = vmatpush1.msra.mxu0 0.0
    %215 = vmatprep.subr.mxu0 0.0
    %216 = vmatpush1.msra.mxu0 0.0
    %217 = vmatprep.subr.mxu0 0.0
    %218 = vmatpush1.msra.mxu0 0.0
    %219 = vmatprep.subr.mxu0 0.0
    %220 = vmatpush1.msra.mxu0 0.0
    %221 = vmatprep.subr.mxu0 0.0
    %222 = vmatpush1.msra.mxu0 0.0
    %223 = vmatprep.subr.mxu0 0.0
    %224 = vmatpush1.msra.mxu0 0.0
    %225 = vmatprep.subr.mxu0 0.0
    %226 = vmatpush1.msra.mxu0 0.0
    %227 = vmatprep.subr.mxu0 0.0
    %228 = vmatpush1.msra.mxu0 0.0
    %229 = vmatprep.subr.mxu0 0.0
    %230 = vmatpush1.msra.mxu0 0.0
    %231 = vmatprep.subr.mxu0 0.0
    %232 = vmatpush1.msra.mxu0 0.0
    %233 = vmatprep.subr.mxu0 0.0
    %234 = vmatpush1.msra.mxu0 0.0
    %235 = vmatprep.subr.mxu0 0.0
    %236 = vmatpush1.msra.mxu0 0.0
    %237 = vmatprep.subr.mxu0 0.0
    %238 = vmatpush1.msra.mxu0 0.0
    %239 = vmatprep.subr.mxu0 0.0
    %240 = vmatpush1.msra.mxu0 0.0
    %241 = vmatprep.subr.mxu0 0.0
    %242 = vmatpush1.msra.mxu0 0.0
    %243 = vmatprep.subr.mxu0 0.0
    %244 = vmatpush1.msra.mxu0 0.0
    %245 = vmatprep.subr.mxu0 0.0
    %246 = vmatpush1.msra.mxu0 0.0
    %247 = vmatprep.subr.mxu0 0.0
    %248 = vmatpush1.msra.mxu0 0.0
    %249 = vmatprep.subr.mxu0 0.0
    %250 = vmatpush1.msra.mxu0 0.0
    %251 = vmatprep.mubr.f32.mxu0 0.0
    %252 = vmatmul.mubr.f32.gmra.mrb[0].mxu0 %v185
    %v253 = vpop.f32.mrb[0].mxu0
    %v254 = vadd.f32 %v176, %v253
    %v255 = vpop.f32.mrb[0].mxu0
    %v256 = vadd.f32 %v180, %v255
    %257 = vdwg.mxu0
    %v258 = vld [vmem:[#allocation5] sm:$0xff]
    %v259 = vld [vmem:[#allocation5 + $0x8] sm:$0xff]
    %v260 = vld [vmem:[#allocation5 + $0x10] sm:$0xff]
    %v261 = vld [vmem:[#allocation5 + $0x18] sm:$0xff]
    %v262 = vld [vmem:[#allocation5 + $0x20] sm:$0xff]
    %v263 = vld [vmem:[#allocation5 + $0x28] sm:$0xff]
    %v264 = vld [vmem:[#allocation5 + $0x30] sm:$0xff]
    %v265 = vld [vmem:[#allocation5 + $0x38] sm:$0xff]
    %v266 = vld [vmem:[#allocation5 + $0x40] sm:$0xff]
    %v267 = vld [vmem:[#allocation5 + $0x48] sm:$0xff]
    %v268 = vld [vmem:[#allocation5 + $0x50] sm:$0xff]
    %v269 = vld [vmem:[#allocation5 + $0x58] sm:$0xff]
    %v270 = vld [vmem:[#allocation5 + $0x60] sm:$0xff]
    %v271 = vld [vmem:[#allocation5 + $0x68] sm:$0xff]
    %v272 = vld [vmem:[#allocation5 + $0x70] sm:$0xff]
    %v273 = vld [vmem:[#allocation5 + $0x78] sm:$0xff]
    %v274 = vld [vmem:[%s7] sm:$0x3]
    %v276 = vlaneseq
    %v277 = vshrl.u32 %v276, 7
    %v278 = vsub.s32 0, %v277
    %v279 = vrot.slane %v274, %v278
    %v280 = vlaneseq
    %v281 = vshrl.u32 %v280, 7
    %v282 = vsub.s32 1, %v281
    %v283 = vrot.slane %v274, %v282
    %v287 = vsel %vm183, %v68, 0
    %289 = vmatprep.subr.mxu0 %v259
    %290 = vmatpush1.msra.mxu0 %v258
    %291 = vmatprep.subr.mxu0 %v261
    %292 = vmatpush1.msra.mxu0 %v260
    %293 = vmatprep.subr.mxu0 %v263
    %294 = vmatpush1.msra.mxu0 %v262
    %295 = vmatprep.subr.mxu0 %v265
    %296 = vmatpush1.msra.mxu0 %v264
    %297 = vmatprep.subr.mxu0 %v267
    %298 = vmatpush1.msra.mxu0 %v266
    %299 = vmatprep.subr.mxu0 %v269
    %300 = vmatpush1.msra.mxu0 %v268
    %301 = vmatprep.subr.mxu0 %v271
    %302 = vmatpush1.msra.mxu0 %v270
    %303 = vmatprep.subr.mxu0 %v273
    %304 = vmatpush1.msra.mxu0 %v272
    %305 = vmatprep.subr.mxu0 0.0
    %306 = vmatpush1.msra.mxu0 0.0
    %307 = vmatprep.subr.mxu0 0.0
    %308 = vmatpush1.msra.mxu0 0.0
    %309 = vmatprep.subr.mxu0 0.0
    %310 = vmatpush1.msra.mxu0 0.0
    %311 = vmatprep.subr.mxu0 0.0
    %312 = vmatpush1.msra.mxu0 0.0
    %313 = vmatprep.subr.mxu0 0.0
    %314 = vmatpush1.msra.mxu0 0.0
    %315 = vmatprep.subr.mxu0 0.0
    %316 = vmatpush1.msra.mxu0 0.0
    %317 = vmatprep.subr.mxu0 0.0
    %318 = vmatpush1.msra.mxu0 0.0
    %319 = vmatprep.subr.mxu0 0.0
    %320 = vmatpush1.msra.mxu0 0.0
    %321 = vmatprep.subr.mxu0 0.0
    %322 = vmatpush1.msra.mxu0 0.0
    %323 = vmatprep.subr.mxu0 0.0
    %324 = vmatpush1.msra.mxu0 0.0
    %325 = vmatprep.subr.mxu0 0.0
    %326 = vmatpush1.msra.mxu0 0.0
    %327 = vmatprep.subr.mxu0 0.0
    %328 = vmatpush1.msra.mxu0 0.0
    %329 = vmatprep.subr.mxu0 0.0
    %330 = vmatpush1.msra.mxu0 0.0
    %331 = vmatprep.subr.mxu0 0.0
    %332 = vmatpush1.msra.mxu0 0.0
    %333 = vmatprep.subr.mxu0 0.0
    %334 = vmatpush1.msra.mxu0 0.0
    %335 = vmatprep.subr.mxu0 0.0
    %336 = vmatpush1.msra.mxu0 0.0
    %337 = vmatprep.subr.mxu0 0.0
    %338 = vmatpush1.msra.mxu0 0.0
    %339 = vmatprep.subr.mxu0 0.0
    %340 = vmatpush1.msra.mxu0 0.0
    %341 = vmatprep.subr.mxu0 0.0
    %342 = vmatpush1.msra.mxu0 0.0
    %343 = vmatprep.subr.mxu0 0.0
    %344 = vmatpush1.msra.mxu0 0.0
    %345 = vmatprep.subr.mxu0 0.0
    %346 = vmatpush1.msra.mxu0 0.0
    %347 = vmatprep.subr.mxu0 0.0
    %348 = vmatpush1.msra.mxu0 0.0
    %349 = vmatprep.subr.mxu0 0.0
    %350 = vmatpush1.msra.mxu0 0.0
    %351 = vmatprep.subr.mxu0 0.0
    %352 = vmatpush1.msra.mxu0 0.0
    %353 = vmatprep.mubr.f32.mxu0 0.0
    %354 = vmatmul.mubr.f32.gmra.mrb[0].mxu0 %v287
    %v355 = vpop.f32.mrb[0].mxu0
    %v356 = vadd.f32 %v279, %v355
    %v357 = vpop.f32.mrb[0].mxu0
    %v358 = vadd.f32 %v283, %v357
    %359 = vdwg.mxu0
    %v360 = vadd.f32 %v254, %v356
    %v361 = vxor.u32 %v360, 2147483648
    %v362 = vmul.f32 %v361, 1.442695
    %v363 = vpow.pop %v362
    %v364 = vadd.f32 %v363, 1.0
    %v365 = vrcp.pop %v364
    %v366 = vmul.f32 1.0, %v365
    %v367 = vmul.f32 %v366, %v358
    %v368 = vadd.f32 %v256, %v367
    %v369 = vtanh.pop %v368
    %v370 = vsub.f32 1.0, %v366
    %372 = vrot.lane.b32.xlu0 %v369, 64
    %v373 = vpop.permute.xlu0 %372
    %v375 = vmul.f32 %v370, %v373
    %376 = vrot.lane.b32.xlu0 %v68, 64
    %v377 = vpop.permute.xlu0 %376
    %v379 = vmul.f32 %v366, %v377
    %v380 = vadd.f32 %v375, %v379
    %v381 = vld [vmem:[%s8] sm:$0xff]
    %v382 = vld [vmem:[%s8 + $0x8] sm:$0xff]
    %v383 = vld [vmem:[%s8 + $0x10] sm:$0xff]
    %v384 = vld [vmem:[%s8 + $0x18] sm:$0xff]
    %v385 = vld [vmem:[%s8 + $0x20] sm:$0xff]
    %v386 = vld [vmem:[%s8 + $0x28] sm:$0xff]
    %v387 = vld [vmem:[%s8 + $0x30] sm:$0xff]
    %v388 = vld [vmem:[%s8 + $0x38] sm:$0xff]
    %v389 = vld [vmem:[%s9] sm:$0x1]
    %v391 = vlaneseq
    %v392 = vshrl.u32 %v391, 7
    %v393 = vsub.s32 0, %v392
    %v394 = vrot.slane %v389, %v393
    %397 = vrot.lane.b32.xlu0 %v380, 64
    %v398 = vpop.permute.xlu0 %397
    %v399 = vsel %vm183, %v398, 0
    %401 = vmatprep.subr.mxu0 0.0
    %402 = vmatpush1.msra.mxu0 %v381
    %403 = vmatprep.subr.mxu0 0.0
    %404 = vmatpush1.msra.mxu0 %v382
    %405 = vmatprep.subr.mxu0 0.0
    %406 = vmatpush1.msra.mxu0 %v383
    %407 = vmatprep.subr.mxu0 0.0
    %408 = vmatpush1.msra.mxu0 %v384
    %409 = vmatprep.subr.mxu0 0.0
    %410 = vmatpush1.msra.mxu0 %v385
    %411 = vmatprep.subr.mxu0 0.0
    %412 = vmatpush1.msra.mxu0 %v386
    %413 = vmatprep.subr.mxu0 0.0
    %414 = vmatpush1.msra.mxu0 %v387
    %415 = vmatprep.subr.mxu0 0.0
    %416 = vmatpush1.msra.mxu0 %v388
    %417 = vmatprep.subr.mxu0 0.0
    %418 = vmatpush1.msra.mxu0 0.0
    %419 = vmatprep.subr.mxu0 0.0
    %420 = vmatpush1.msra.mxu0 0.0
    %421 = vmatprep.subr.mxu0 0.0
    %422 = vmatpush1.msra.mxu0 0.0
    %423 = vmatprep.subr.mxu0 0.0
    %424 = vmatpush1.msra.mxu0 0.0
    %425 = vmatprep.subr.mxu0 0.0
    %426 = vmatpush1.msra.mxu0 0.0
    %427 = vmatprep.subr.mxu0 0.0
    %428 = vmatpush1.msra.mxu0 0.0
    %429 = vmatprep.subr.mxu0 0.0
    %430 = vmatpush1.msra.mxu0 0.0
    %431 = vmatprep.subr.mxu0 0.0
    %432 = vmatpush1.msra.mxu0 0.0
    %433 = vmatprep.subr.mxu0 0.0
    %434 = vmatpush1.msra.mxu0 0.0
    %435 = vmatprep.subr.mxu0 0.0
    %436 = vmatpush1.msra.mxu0 0.0
    %437 = vmatprep.subr.mxu0 0.0
    %438 = vmatpush1.msra.mxu0 0.0
    %439 = vmatprep.subr.mxu0 0.0
    %440 = vmatpush1.msra.mxu0 0.0
    %441 = vmatprep.subr.mxu0 0.0
    %442 = vmatpush1.msra.mxu0 0.0
    %443 = vmatprep.subr.mxu0 0.0
    %444 = vmatpush1.msra.mxu0 0.0
    %445 = vmatprep.subr.mxu0 0.0
    %446 = vmatpush1.msra.mxu0 0.0
    %447 = vmatprep.subr.mxu0 0.0
    %448 = vmatpush1.msra.mxu0 0.0
    %449 = vmatprep.subr.mxu0 0.0
    %450 = vmatpush1.msra.mxu0 0.0
    %451 = vmatprep.subr.mxu0 0.0
    %452 = vmatpush1.msra.mxu0 0.0
    %453 = vmatprep.subr.mxu0 0.0
    %454 = vmatpush1.msra.mxu0 0.0
    %455 = vmatprep.subr.mxu0 0.0
    %456 = vmatpush1.msra.mxu0 0.0
    %457 = vmatprep.subr.mxu0 0.0
    %458 = vmatpush1.msra.mxu0 0.0
    %459 = vmatprep.subr.mxu0 0.0
    %460 = vmatpush1.msra.mxu0 0.0
    %461 = vmatprep.subr.mxu0 0.0
    %462 = vmatpush1.msra.mxu0 0.0
    %463 = vmatprep.subr.mxu0 0.0
    %464 = vmatpush1.msra.mxu0 0.0
    %465 = vmatprep.mubr.f32.mxu0 0.0
    %466 = vmatmul.mubr.f32.gmra.mrb[0].mxu0 %v399
    %v467 = vpop.f32.mrb[0].mxu0
    %v468 = vadd.f32 %v394, %v467
    %v469 = vpop.f32.mrb[0].mxu0
    %470 = vdwg.mxu0
    %vm471 = vcmask 64512
    %472 = vst.msk [vmem:[#allocation7] sm:$0xff] %vm471, %v468
    %474 = vst.msk [vmem:[#allocation8] sm:$0xff] %vm183, %v398
    // Predicated region
    $region50: #{rnn_agent_forward.1} parent=1 // pred_check
      _
    $region51: #{rnn_agent_forward.1} parent=1 // pred_check_branch
      %476 = sbr.rel (0) target = $region53
    $region52: #{rnn_agent_forward.1} parent=1 // pred_region
      %s478 = ssub.s32 128, 128
      %479 = vsyncadd [#allocation4], %s478
      %s481 = sshll.u32 [#allocation7], 4
      %s482 = int_to_ptr.vmem [resolvable:$true] %s481
      %484 = dma.vmem_to_hbm [thread:$0]  %s482, 128, %s10, [#allocation4]
    $region53: #{rnn_agent_forward.1} parent=1 // pred_fallthru
      _
    // Predicated region
    $region54: #{rnn_agent_forward.1} parent=1 // pred_check
      _
    $region55: #{rnn_agent_forward.1} parent=1 // pred_check_branch
      %486 = sbr.rel (0) target = $region57
    $region56: #{rnn_agent_forward.1} parent=1 // pred_region
      %s488 = ssub.s32 128, 128
      %489 = vsyncadd [#allocation9], %s488
      %s491 = sshll.u32 [#allocation8], 4
      %s492 = int_to_ptr.vmem [resolvable:$true] %s491
      %494 = dma.vmem_to_hbm [thread:$0]  %s492, 128, %s11, [#allocation9]
    $region57: #{rnn_agent_forward.1} parent=1 // pred_fallthru
      _
    // Predicated region
    $region58: #{rnn_agent_forward.1} parent=1 // pred_check
      _
    $region59: #{rnn_agent_forward.1} parent=1 // pred_check_branch
      %496 = sbr.rel (0) target = $region61
    $region60: #{rnn_agent_forward.1} parent=1 // pred_region
      %497 = dma.done [#allocation4], 128
    $region61: #{rnn_agent_forward.1} parent=1 // pred_fallthru
      _
    // Predicated region
    $region62: #{rnn_agent_forward.1} parent=1 // pred_check
      _
    $region63: #{rnn_agent_forward.1} parent=1 // pred_check_branch
      %499 = sbr.rel (0) target = $region65
    $region64: #{rnn_agent_forward.1} parent=1 // pred_region
      %500 = dma.done [#allocation9], 128
    $region65: #{rnn_agent_forward.1} parent=1 // pred_fallthru
      _
    %501 = vsyncpa [#allocation3], 1
    %502 = vsyncpa [#allocation6], 1
    %503 = vsyncpa [#allocation4], 1
    %504 = vsyncpa [#allocation9], 1

</llo_original>
